<compile_context>
chip_gen: v5e
topology: v5e:2x2
jax: 0.10.0
libtpu: 0.0.40
codegen_flags: <defaults>
</compile_context>

<pallas_src>
import functools

import jax
import jax.numpy as jnp
import numpy as np
from jax.experimental import pallas as pl
from jax.experimental.pallas import tpu as pltpu


# ----------------------------------------------------------------------------
# Kernel
# ----------------------------------------------------------------------------
def _mimic_kernel(mask_ref, t_ref, s_ref, out_ref, *, bf16_math):
    """One grid step = (batch item i, spatial chunk k).

    mask_ref : (1, 1, TK)   f32 {0,1} rasterized union-of-priors mask chunk.
    t_ref    : (1, C, TK)   teacher feature chunk (native dtype).
    s_ref    : (1, C, TK)   student feature chunk (native dtype).
    out_ref  : (1, 1, 2,128) sublane 0 = masked sq-diff sum, sublane 1 = mask sum
               (scalar replicated across lanes).
    """
    t = t_ref[0]                                        # (C, TK)
    s = s_ref[0]                                        # (C, TK)
    if bf16_math and t.dtype == jnp.bfloat16:
        # bf16 VALU packs 2 elems/lane on v6e/v7x; widen only at the accumulate.
        d = s - t
        csum = jnp.sum((d * d).astype(jnp.float32), axis=0, keepdims=True)
    else:
        d = s.astype(jnp.float32) - t.astype(jnp.float32)
        csum = jnp.sum(d * d, axis=0, keepdims=True)    # (1, TK)

    m = mask_ref[0].astype(jnp.float32)                 # (1, TK) {0,1}
    # Reduce over C first, then apply the {0,1} mask to the (1, TK) partial:
    # sum(mask * sum_c d^2) == sum((mask*(s-t))^2) because mask is 0/1.
    sq = jnp.sum(csum * m)
    ms = jnp.sum(m)

    # Single merged store: sublane 0 <- sq, sublane 1 <- ms.
    row = jax.lax.broadcasted_iota(jnp.int32, out_ref.shape, 2)
    out_ref[...] = jnp.where(row == 0, sq, ms)


# ----------------------------------------------------------------------------
# Tiling helpers
# ----------------------------------------------------------------------------
def _round_up(x, m):
    return ((x + m - 1) // m) * m


def _vmem_capacity_bytes():
    try:
        return int(pltpu.get_tpu_info().vmem_capacity_bytes)
    except Exception:
        return 128 * 1024 * 1024


def _supports_bf16_valu():
    """v5e (and older) have no bf16 VPU; keep the explicit f32 path there."""
    try:
        kind = jax.devices()[0].device_kind.lower()
    except Exception:
        return True
    return not any(v in kind for v in ("v2", "v3", "v4", "v5"))


def _pick_chunk(hw, c, itemsize, vmem_limit_bytes):
    """Lane-aligned (multiple of 128) chunk TK of the flattened H*W axis.

    Generation-aware: per-(C,TK) input block targets ~5 MiB on v5e/v6e
    (128 MiB physical VMEM) and ~3 MiB on v7x (64 MiB).  Also bounds the
    total live bytes -- 2 inputs x 2 pipeline buffers plus ~3x f32(C,TK)
    temporaries for the cast/diff/square chain -- under the scoped vmem
    limit passed to the kernel, with ~2 MiB headroom.
    """
    hw128 = _round_up(hw, 128)
    phys = _vmem_capacity_bytes()
    per_block_target = (5 if phys >= 96 * 1024 * 1024 else 3) * 1024 * 1024

    bytes_per_col = 2 * 2 * c * itemsize + 3 * c * 4   # inputs(dbl-buf) + f32 temps
    tk_total = (vmem_limit_bytes - 2 * 1024 * 1024) // max(1, bytes_per_col)
    tk_block = per_block_target // max(1, c * itemsize)

    tk = min(hw128, tk_total, tk_block)
    return max(128, (tk // 128) * 128)


# ----------------------------------------------------------------------------
# Wrapper
# ----------------------------------------------------------------------------
def mimic_loss(map_t, map_s, mimic_label, priors):
    """JAX/Pallas equivalent of MimicLoss.forward (uses feature level [2])."""
    t = jnp.asarray(map_t[2])
    s = jnp.asarray(map_s[2])
    B, C, H, W = t.shape
    HW = H * W

    # ---- per-prior integer pixel bounds (int32 cast truncates toward 0 like
    #      python int(); max/min clamp identically to the reference) ----------
    pr = jnp.asarray(priors, jnp.float32)
    cx, cy, w, h = pr[:, 0], pr[:, 1], pr[:, 2], pr[:, 3]
    x_min = jnp.maximum(0, ((cx - w / 2) * W).astype(jnp.int32))
    y_min = jnp.maximum(0, ((cy - h / 2) * H).astype(jnp.int32))
    x_max = jnp.minimum(((cx + w / 2) * W).astype(jnp.int32), W)
    y_max = jnp.minimum(((cy + h / 2) * H).astype(jnp.int32), H)

    # ---- rasterize the union-of-boxes mask per batch item.  The P-reduction
    #      goes through a tiny (B,P)@(P,HW) matmul (MXU) instead of a
    #      B*P*H*W broadcast + any-reduce. ------------------------------------
    row = jnp.arange(H, dtype=jnp.int32)
    col = jnp.arange(W, dtype=jnp.int32)
    in_y = (row[None, :] >= y_min[:, None]) & (row[None, :] < y_max[:, None])   # (P, H)
    in_x = (col[None, :] >= x_min[:, None]) & (col[None, :] < x_max[:, None])   # (P, W)
    inbox = (in_y[:, :, None] & in_x[:, None, :]).reshape(-1, HW)               # (P, HW)
    pos = (jnp.asarray(mimic_label) > 0).astype(jnp.float32)                    # (B, P)
    hits = jnp.dot(pos, inbox.astype(jnp.float32),
                   preferred_element_type=jnp.float32)                          # (B, HW)
    mask = (hits > 0).astype(jnp.float32).reshape(B, 1, HW)

    # ---- lane-dense flatten; keep native dtype (cast happens in-kernel) ----
    t_flat = t.reshape(B, C, HW)
    s_flat = s.reshape(B, C, HW)

    itemsize = jnp.dtype(t.dtype).itemsize
    vmem_limit = 32 * 1024 * 1024
    TK = _pick_chunk(HW, C, itemsize, vmem_limit)

    # Pad H*W up to a multiple of TK (zeros in features AND mask -> padded
    # lanes contribute nothing to either reduction).
    HW_pad = _round_up(HW, TK)
    if HW_pad != HW:
        pad = HW_pad - HW
        t_flat = jnp.pad(t_flat, ((0, 0), (0, 0), (0, pad)))
        s_flat = jnp.pad(s_flat, ((0, 0), (0, 0), (0, pad)))
        mask = jnp.pad(mask, ((0, 0), (0, 0), (0, pad)))
    nk = HW_pad // TK

    # Note: for C < 8 the (C,TK) tile is sublane-padded to 8 (<=50% sublane
    # utilization); real mimic layers have C >= 64 so this is accepted.
    kernel = functools.partial(_mimic_kernel, bf16_math=_supports_bf16_valu())

    out = pl.pallas_call(
        kernel,
        grid=(B, nk),
        in_specs=[
            pl.BlockSpec((1, 1, TK), lambda i, k: (i, 0, k)),
            pl.BlockSpec((1, C, TK), lambda i, k: (i, 0, k)),
            pl.BlockSpec((1, C, TK), lambda i, k: (i, 0, k)),
        ],
        out_specs=pl.BlockSpec((1, 1, 2, 128), lambda i, k: (i, k, 0, 0)),
        out_shape=jax.ShapeDtypeStruct((B, nk, 2, 128), jnp.float32),
        compiler_params=pltpu.CompilerParams(
            dimension_semantics=("parallel", "parallel"),
            vmem_limit_bytes=vmem_limit),
    )(mask, t_flat, s_flat)

    sq = jnp.sum(out[:, :, 0, 0], axis=1)   # (B,) masked squared-diff sums
    ms = jnp.sum(out[:, :, 1, 0], axis=1)   # (B,) mask sums

    # ---- reference loop semantics, vectorized.  The PyTorch loop RESETS the
    # accumulated loss to 0 whenever a batch item has an empty mask, so only
    # items strictly after the last empty-mask item contribute. ---------------
    idx = jnp.arange(B)
    empty = ms == 0.0
    last_empty = jnp.max(jnp.where(empty, idx, -1))
    term = sq / jnp.where(empty, 1.0, ms) / C
    loss = jnp.sum(jnp.where(idx > last_empty, term, 0.0))
    return loss / B


# ----------------------------------------------------------------------------
# Pure-numpy reference mirroring the PyTorch loop semantics
# ----------------------------------------------------------------------------
def mimic_loss_ref(map_t, map_s, mimic_label, priors):
    t = np.asarray(map_t[2], np.float32)
    s = np.asarray(map_s[2], np.float32)
    lab = np.asarray(mimic_label)
    pr = np.asarray(priors, np.float32)
    B, C, H, W = t.shape
    loss = 0.0
    for i in range(B):
        mask = np.zeros((H, W), np.float32)
        for j in range(lab.shape[1]):
            if lab[i, j] > 0:
                x_min = pr[j, 0] - pr[j, 2] / 2
                y_min = pr[j, 1] - pr[j, 3] / 2
                x_max = pr[j, 0] + pr[j, 2] / 2
                y_max = pr[j, 1] + pr[j, 3] / 2
                x_min = max(0, int(x_min * W))
                y_min = max(0, int(y_min * H))
                x_max = min(int(x_max * W), W)
                y_max = min(int(y_max * H), H)
                mask[y_min:y_max, x_min:x_max] = 1.0
        if mask.sum() == 0.0:
            loss = 0.0
            continue
        loss += (((s[i] - t[i]) * mask[None]) ** 2).sum() / mask.sum() / C
    return loss / B


if __name__ == "__main__":
    key = jax.random.PRNGKey(0)
    B, C, H, W, P = 2, 4, 16, 16, 8
    k1, k2, k3, k4, k5 = jax.random.split(key, 5)

    map_t2 = jax.random.normal(k1, (B, C, H, W), jnp.float32)
    map_s2 = jax.random.normal(k2, (B, C, H, W), jnp.float32)
    # forward only reads level [2] of the feature pyramids
    map_t = [map_t2, map_t2, map_t2]
    map_s = [map_s2, map_s2, map_s2]

    cxcy = jax.random.uniform(k3, (P, 2), minval=0.2, maxval=0.8)
    wh = jax.random.uniform(k4, (P, 2), minval=0.2, maxval=0.5)
    priors = jnp.concatenate([cxcy, wh], axis=1).astype(jnp.float32)
    mimic_label = jax.random.randint(k5, (B, P), 0, 3)

    out = mimic_loss(map_t, map_s, mimic_label, priors)
    out = jax.block_until_ready(out)

    ref = mimic_loss_ref(map_t, map_s, mimic_label, priors)
    assert abs(float(out) - float(ref)) <= 1e-4 * max(1.0, abs(float(ref))), \
        f"mismatch: pallas={float(out)} ref={float(ref)}"
    print("KERNEL_OK")
</pallas_src>

<mosaic_0001>
module attributes {stable_mosaic.version = 11 : i64} {
  func.func @_mimic_kernel(%arg0: i32, %arg1: i32, %arg2: memref<1x1x256xf32, #tpu.memory_space<vmem>>, %arg3: memref<1x4x256xf32, #tpu.memory_space<vmem>>, %arg4: memref<1x4x256xf32, #tpu.memory_space<vmem>>, %arg5: memref<1x1x2x128xf32, #tpu.memory_space<vmem>>) attributes {dimension_semantics = [#tpu.dimension_semantics<parallel>, #tpu.dimension_semantics<parallel>], iteration_bounds = array<i64: 2, 1>, scalar_prefetch = 0 : i64, scratch_operands = 0 : i64, tpu.core_type = #tpu.core_type<tc>, window_params = [{transform_indices = @transform_0, window_bounds = array<i64: 1, 1, 256>}, {transform_indices = @transform_1, window_bounds = array<i64: 1, 4, 256>}, {transform_indices = @transform_2, window_bounds = array<i64: 1, 4, 256>}, {transform_indices = @transform_3, window_bounds = array<i64: 1, 1, 2, 128>}]} {
    %c0 = arith.constant 0 : index
    %c0_0 = arith.constant 0 : index
    %c0_1 = arith.constant 0 : index
    %0 = vector.load %arg3[%c0, %c0_0, %c0_1] : memref<1x4x256xf32, #tpu.memory_space<vmem>>, vector<1x4x256xf32>
    %1 = vector.shape_cast %0 : vector<1x4x256xf32> to vector<4x256xf32>
    %c0_2 = arith.constant 0 : index
    %c0_3 = arith.constant 0 : index
    %c0_4 = arith.constant 0 : index
    %2 = vector.load %arg4[%c0_2, %c0_3, %c0_4] : memref<1x4x256xf32, #tpu.memory_space<vmem>>, vector<1x4x256xf32>
    %3 = vector.shape_cast %2 : vector<1x4x256xf32> to vector<4x256xf32>
    %4 = arith.subf %3, %1 : vector<4x256xf32>
    %5 = arith.mulf %4, %4 : vector<4x256xf32>
    %cst = arith.constant dense<0.000000e+00> : vector<256xf32>
    %6 = vector.multi_reduction <add>, %5, %cst [0] : vector<4x256xf32> to vector<256xf32>
    %7 = vector.shape_cast %6 : vector<256xf32> to vector<1x256xf32>
    %c0_5 = arith.constant 0 : index
    %c0_6 = arith.constant 0 : index
    %c0_7 = arith.constant 0 : index
    %8 = vector.load %arg2[%c0_5, %c0_6, %c0_7] : memref<1x1x256xf32, #tpu.memory_space<vmem>>, vector<1x1x256xf32>
    %9 = vector.shape_cast %8 : vector<1x1x256xf32> to vector<1x256xf32>
    %10 = arith.mulf %7, %9 : vector<1x256xf32>
    %11 = vector.shape_cast %10 : vector<1x256xf32> to vector<1x1x256xf32>
    %cst_8 = arith.constant dense<0.000000e+00> : vector<1xf32>
    %12 = vector.multi_reduction <add>, %11, %cst_8 [1, 2] : vector<1x1x256xf32> to vector<1xf32>
    %13 = vector.shape_cast %12 : vector<1xf32> to vector<1x1x1xf32>
    %14 = vector.extract %13[0, 0, 0] : f32 from vector<1x1x1xf32>
    %15 = vector.shape_cast %9 : vector<1x256xf32> to vector<1x1x256xf32>
    %cst_9 = arith.constant dense<0.000000e+00> : vector<1xf32>
    %16 = vector.multi_reduction <add>, %15, %cst_9 [1, 2] : vector<1x1x256xf32> to vector<1xf32>
    %17 = vector.shape_cast %16 : vector<1xf32> to vector<1x1x1xf32>
    %18 = vector.extract %17[0, 0, 0] : f32 from vector<1x1x1xf32>
    %19 = tpu.iota {dimensions = array<i32: 2>} : vector<1x1x2x128xi32>
    %c0_i32 = arith.constant 0 : i32
    %20 = vector.broadcast %c0_i32 : i32 to vector<1x1x2x128xi32>
    %21 = arith.cmpi eq, %19, %20 : vector<1x1x2x128xi32>
    %22 = vector.broadcast %14 : f32 to vector<1x1x2x128xf32>
    %23 = vector.broadcast %18 : f32 to vector<1x1x2x128xf32>
    %24 = arith.select %21, %22, %23 : vector<1x1x2x128xi1>, vector<1x1x2x128xf32>
    %c0_10 = arith.constant 0 : index
    %c0_11 = arith.constant 0 : index
    %c0_12 = arith.constant 0 : index
    %c0_13 = arith.constant 0 : index
    %25 = vector.load %arg5[%c0_10, %c0_11, %c0_12, %c0_13] : memref<1x1x2x128xf32, #tpu.memory_space<vmem>>, vector<1x1x2x128xf32>
    tpu.vector_store %arg5[%c0_10, %c0_11, %c0_12, %c0_13], %24 {strides = array<i32>} : memref<1x1x2x128xf32, #tpu.memory_space<vmem>>, vector<1x1x2x128xf32>,
    return
  }
  func.func @transform_0(%arg0: i32, %arg1: i32) -> (i32, i32, i32) {
    %c0_i32 = arith.constant 0 : i32
    %c0_i32_0 = arith.constant 0 : i32
    return %arg0, %c0_i32, %arg1 : i32, i32, i32
  }
  func.func @transform_1(%arg0: i32, %arg1: i32) -> (i32, i32, i32) {
    %c0_i32 = arith.constant 0 : i32
    %c0_i32_0 = arith.constant 0 : i32
    return %arg0, %c0_i32, %arg1 : i32, i32, i32
  }
  func.func @transform_2(%arg0: i32, %arg1: i32) -> (i32, i32, i32) {
    %c0_i32 = arith.constant 0 : i32
    %c0_i32_0 = arith.constant 0 : i32
    return %arg0, %c0_i32, %arg1 : i32, i32, i32
  }
  func.func @transform_3(%arg0: i32, %arg1: i32) -> (i32, i32, i32, i32) {
    %c0_i32 = arith.constant 0 : i32
    %c0_i32_0 = arith.constant 0 : i32
    %c0_i32_1 = arith.constant 0 : i32
    return %arg0, %arg1, %c0_i32, %c0_i32_0 : i32, i32, i32, i32
  }
}

</mosaic_0001>

<llo_original>
// kernel: tpu_custom_call.1
$region0: #{tpu_custom_call.1}
  #allocation0 [shape = 'u32[]', space=smem, size = 0x4, offset = 0x4, fixed_abs, tag = 'smem constant byte address 0x4 - core index']
  #allocation1 [shape = 'u32[72,128]{1,0:T(1,128)}', space=vmem, size = 0x9000, scoped, tag = 'internal scratch']
  %s0 = inlined_call_operand.hbm [shape: f32[2,1,256], index: 0, kind: input, shape index: {}]
  %s1 = inlined_call_operand.hbm [shape: f32[2,4,256], index: 1, kind: input, shape index: {}]
  %s2 = inlined_call_operand.hbm [shape: f32[2,4,256], index: 2, kind: input, shape index: {}]
  %s3 = inlined_call_operand.hbm [shape: f32[2,1,2,128], index: 3, kind: output, shape index: {}]
  %s4 = sld [smem:[#allocation0]]
  $region57: #{tpu_custom_call.1} parent=0
    _
  %s6 = ssub.s32 1, %s4
  %s7 = scalar_select 0, %s6, %s4
  $region1: #{tpu_custom_call.1} parent=0
    #allocation2 [shape = 'u8[2048]{0}', space=vmem, size = 0x800, scoped, tag = 'input window, operand 0']
    #allocation3 [shape = 's32[2]{0}', space=sflag, size = 0x8, scoped, tag = 'scoped memory for tpu_custom_call.1']
    #allocation4 [shape = 's32[2]{0}', space=sflag, size = 0x8, scoped, tag = 'scoped memory for tpu_custom_call.1']
    #allocation5 [shape = 'u8[8192]{0}', space=vmem, size = 0x2000, scoped, tag = 'input window, operand 1']
    #allocation6 [shape = 's32[2]{0}', space=sflag, size = 0x8, scoped, tag = 'scoped memory for tpu_custom_call.1']
    #allocation7 [shape = 'u8[8192]{0}', space=vmem, size = 0x2000, scoped, tag = 'input window, operand 2']
    #allocation8 [shape = 'u8[2048]{0}', space=vmem, size = 0x800, scoped, tag = 'output window, operand 0']
    %8 = vsyncpa [#allocation3], 0
    %s9 = scalar_lea.sflag [#allocation3], 1
    %10 = vsyncpa %s9, 0
    %11 = vsyncpa [#allocation6], 0
    %s12 = scalar_lea.sflag [#allocation6], 1
    %13 = vsyncpa %s12, 0
    %14 = vsyncpa [#allocation4], 0
    %s15 = scalar_lea.sflag [#allocation4], 1
    %16 = vsyncpa %s15, 0
    loop: start=0, step=1, limit=4
    $region2: #{tpu_custom_call.1} parent=1 // loop_pre_header
      _
    $region3: #{tpu_custom_call.1} parent=1 // loop_header
      %s18 = sphi 0, %s22
      %p19 = scmp.ge.s32.totalorder %s18, 4
      %s25 = sphi 0, %s37
      %s26 = sphi 0, %s33
      %s27 = sphi 0, %s25
      %s28 = sphi 0, %s26
      %s29 = sphi 0, %s27
      %s30 = sphi 0, %s28
      %s42 = sphi 0, %s44
      %s45 = sphi 0, %s42
      %s46 = sphi 0, %s45
      %s62 = sphi 0, %s46
      %s70 = sphi 0, %s72
      %s73 = sphi 0, %s70
      %s74 = sphi 0, %s73
      %s90 = sphi 0, %s74
      %s98 = sphi 0, %s100
      %s101 = sphi 0, %s98
      %s102 = sphi 0, %s101
      %s118 = sphi 0, %s102
      %s126 = sphi 0, %s128
      %s129 = sphi 0, %s126
      %s130 = sphi 0, %s129
      %s146 = sphi 0, %s130
    $region4: #{tpu_custom_call.1} parent=1 // loop_header_branch
      %21 = sbr.rel (%p19) target = $region8
    $region5: #{tpu_custom_call.1} parent=1 // loop_body
      %s23 = ssub.s32 %s18, 1
      %s24 = ssub.s32 %s18, 2
      %s31 = sadd.s32 1, %s26
      %p32 = scmp.ge.s32.totalorder %s31, 1
      %s33 = scalar_select %p32, 0, %s31
      %s34 = sadd.s32 1, %s25
      %s35 = scalar_select %p32, %s34, %s25
      %p36 = scmp.ge.s32.totalorder %s35, 2
      %s37 = scalar_select %p36, 0, %s35
      %s38 = ssub.s32 %s25, %s37
      %s39 = ssub.s32 %s26, %s33
      %s40 = sor.u32 %s38, %s39
      %p41 = scmp.eq.s32.totalorder %s40, 0
      %s43 = sadd.s32 %s42, 1
      %s44 = scalar_select %p41, %s42, %s43
      %p47 = pneg %p41
      %p48 = scmp.eq.s32.totalorder %s18, 1
      %p49 = por %p47, %p48
      %p50 = scmp.ne.s32.totalorder %s42, %s45
      %p51 = scmp.eq.s32.totalorder %s18, 0
      %p52 = por %p50, %p51
      %p53 = scmp.ne.s32.totalorder %s42, %s45
      %p54 = scmp.eq.s32.totalorder %s23, 1
      %p55 = por %p53, %p54
      %p56 = scmp.ne.s32.totalorder %s45, %s46
      %p57 = scmp.eq.s32.totalorder %s23, 0
      %p58 = por %p56, %p57
      %p59 = scmp.ne.s32.totalorder %s45, %s46
      %p60 = scmp.eq.s32.totalorder %s24, 1
      %p61 = por %p59, %p60
      %p63 = scmp.ne.s32.totalorder %s46, %s62
      %p64 = scmp.eq.s32.totalorder %s24, 0
      %p65 = por %p63, %p64
      %s66 = ssub.s32 %s25, %s37
      %s67 = ssub.s32 %s26, %s33
      %s68 = sor.u32 %s66, %s67
      %p69 = scmp.eq.s32.totalorder %s68, 0
      %s71 = sadd.s32 %s70, 1
      %s72 = scalar_select %p69, %s70, %s71
      %p75 = pneg %p69
      %p76 = scmp.eq.s32.totalorder %s18, 1
      %p77 = por %p75, %p76
      %p78 = scmp.ne.s32.totalorder %s70, %s73
      %p79 = scmp.eq.s32.totalorder %s18, 0
      %p80 = por %p78, %p79
      %p81 = scmp.ne.s32.totalorder %s70, %s73
      %p82 = scmp.eq.s32.totalorder %s23, 1
      %p83 = por %p81, %p82
      %p84 = scmp.ne.s32.totalorder %s73, %s74
      %p85 = scmp.eq.s32.totalorder %s23, 0
      %p86 = por %p84, %p85
      %p87 = scmp.ne.s32.totalorder %s73, %s74
      %p88 = scmp.eq.s32.totalorder %s24, 1
      %p89 = por %p87, %p88
      %p91 = scmp.ne.s32.totalorder %s74, %s90
      %p92 = scmp.eq.s32.totalorder %s24, 0
      %p93 = por %p91, %p92
      %s94 = ssub.s32 %s25, %s37
      %s95 = ssub.s32 %s26, %s33
      %s96 = sor.u32 %s94, %s95
      %p97 = scmp.eq.s32.totalorder %s96, 0
      %s99 = sadd.s32 %s98, 1
      %s100 = scalar_select %p97, %s98, %s99
      %p103 = pneg %p97
      %p104 = scmp.eq.s32.totalorder %s18, 1
      %p105 = por %p103, %p104
      %p106 = scmp.ne.s32.totalorder %s98, %s101
      %p107 = scmp.eq.s32.totalorder %s18, 0
      %p108 = por %p106, %p107
      %p109 = scmp.ne.s32.totalorder %s98, %s101
      %p110 = scmp.eq.s32.totalorder %s23, 1
      %p111 = por %p109, %p110
      %p112 = scmp.ne.s32.totalorder %s101, %s102
      %p113 = scmp.eq.s32.totalorder %s23, 0
      %p114 = por %p112, %p113
      %p115 = scmp.ne.s32.totalorder %s101, %s102
      %p116 = scmp.eq.s32.totalorder %s24, 1
      %p117 = por %p115, %p116
      %p119 = scmp.ne.s32.totalorder %s102, %s118
      %p120 = scmp.eq.s32.totalorder %s24, 0
      %p121 = por %p119, %p120
      %s122 = ssub.s32 %s25, %s37
      %s123 = ssub.s32 %s26, %s33
      %s124 = sor.u32 %s122, %s123
      %p125 = scmp.eq.s32.totalorder %s124, 0
      %s127 = sadd.s32 %s126, 1
      %s128 = scalar_select %p125, %s126, %s127
      %p131 = pneg %p125
      %p132 = scmp.eq.s32.totalorder %s18, 1
      %p133 = por %p131, %p132
      %p134 = scmp.ne.s32.totalorder %s126, %s129
      %p135 = scmp.eq.s32.totalorder %s18, 0
      %p136 = por %p134, %p135
      %p137 = scmp.ne.s32.totalorder %s126, %s129
      %p138 = scmp.eq.s32.totalorder %s23, 1
      %p139 = por %p137, %p138
      %p140 = scmp.ne.s32.totalorder %s129, %s130
      %p141 = scmp.eq.s32.totalorder %s23, 0
      %p142 = por %p140, %p141
      %p143 = scmp.ne.s32.totalorder %s129, %s130
      %p144 = scmp.eq.s32.totalorder %s24, 1
      %p145 = por %p143, %p144
      %p147 = scmp.ne.s32.totalorder %s130, %s146
      %p148 = scmp.eq.s32.totalorder %s24, 0
      %p149 = por %p147, %p148
      %p150 = scmp.le.s32.totalorder 1, %s18
      %p151 = scmp.lt.s32.totalorder %s18, 3
      %p152 = pnand %p150, %p151
      %p153 = pneg %p152
      // Predicated region
      $region9: #{tpu_custom_call.1} parent=5 // pred_check
        _
      $region10: #{tpu_custom_call.1} parent=5 // pred_check_branch
        %155 = sbr.rel (%p152) target = $region12
      $region11: #{tpu_custom_call.1} parent=5 // pred_region
        %s156 = ssub.s32 %s18, 1
      $region12: #{tpu_custom_call.1} parent=5 // pred_fallthru
        _
      %p157 = scmp.lt.s32.totalorder %s18, 2
      // Predicated region
      $region13: #{tpu_custom_call.1} parent=5 // pred_check
        %p158 = pneg %p157
      $region14: #{tpu_custom_call.1} parent=5 // pred_check_branch
        %160 = sbr.rel (%p158) target = $region16
      $region15: #{tpu_custom_call.1} parent=5 // pred_region
        // Predicated region
        $region17: #{tpu_custom_call.1} parent=15 // pred_check
          %p161 = pneg %p52
        $region18: #{tpu_custom_call.1} parent=15 // pred_check_branch
          %163 = sbr.rel (%p161) target = $region20
        $region19: #{tpu_custom_call.1} parent=15 // pred_region
          %s164 = sand.u32 %s42, 1
          %s165 = scalar_lea.sflag [#allocation3], %s164
          %s166 = sand.u32 %s42, 1
          %s167 = smul.addr %s166, 2
          %s168 = scalar_lea.vmem [#allocation2], %s167
          %s169 = smul.u32 2, %s26
          %171 = vsyncadd %s165, 0
          %s172 = smul.addr %s25, 2
          %s173 = sadd.s32 %s169, %s172
          %s174 = scalar_lea.hbm %s0, %s173
          %s176 = sshll.u32 %s174, 4
          %s177 = int_to_ptr.hbm [resolvable:$true] %s176
          %s178 = sshll.u32 %s168, 4
          %s179 = int_to_ptr.vmem [resolvable:$true] %s178
          %181 = dma.hbm_to_vmem [thread:$0]  %s177, 32, %s179, %s165
        $region20: #{tpu_custom_call.1} parent=15 // pred_fallthru
          _
        // Predicated region
        $region21: #{tpu_custom_call.1} parent=15 // pred_check
          %p182 = pneg %p80
        $region22: #{tpu_custom_call.1} parent=15 // pred_check_branch
          %184 = sbr.rel (%p182) target = $region24
        $region23: #{tpu_custom_call.1} parent=15 // pred_region
          %s185 = sand.u32 %s18, 1
          %s186 = scalar_lea.sflag [#allocation6], %s185
          %s187 = sand.u32 %s70, 1
          %s188 = smul.addr %s187, 8
          %s189 = scalar_lea.vmem [#allocation5], %s188
          %s190 = smul.u32 2, %s26
          %192 = vsyncadd %s186, 0
          %s193 = smul.addr %s25, 2
          %s194 = sadd.s32 %s190, %s193
          %s195 = smul.addr %s194, 4
          %s196 = scalar_lea.hbm %s1, %s195
          %s198 = sshll.u32 %s196, 4
          %s199 = int_to_ptr.hbm [resolvable:$true] %s198
          %s200 = sshll.u32 %s189, 4
          %s201 = int_to_ptr.vmem [resolvable:$true] %s200
          %203 = dma.hbm_to_vmem [thread:$0]  %s199, 128, %s201, %s186
        $region24: #{tpu_custom_call.1} parent=15 // pred_fallthru
          _
        // Predicated region
        $region25: #{tpu_custom_call.1} parent=15 // pred_check
          %p204 = pneg %p108
        $region26: #{tpu_custom_call.1} parent=15 // pred_check_branch
          %206 = sbr.rel (%p204) target = $region28
        $region27: #{tpu_custom_call.1} parent=15 // pred_region
          %s207 = sand.u32 %s18, 1
          %s208 = scalar_lea.sflag [#allocation6], %s207
          %s209 = sand.u32 %s98, 1
          %s210 = smul.addr %s209, 8
          %s211 = scalar_lea.vmem [#allocation7], %s210
          %s212 = smul.u32 2, %s26
          %214 = vsyncadd %s208, 0
          %s215 = smul.addr %s25, 2
          %s216 = sadd.s32 %s212, %s215
          %s217 = smul.addr %s216, 4
          %s218 = scalar_lea.hbm %s2, %s217
          %s220 = sshll.u32 %s218, 4
          %s221 = int_to_ptr.hbm [resolvable:$true] %s220
          %s222 = sshll.u32 %s211, 4
          %s223 = int_to_ptr.vmem [resolvable:$true] %s222
          %225 = dma.hbm_to_vmem [thread:$0]  %s221, 128, %s223, %s208
        $region28: #{tpu_custom_call.1} parent=15 // pred_fallthru
          _
      $region16: #{tpu_custom_call.1} parent=5 // pred_fallthru
        _
      %p226 = scmp.le.s32.totalorder 1, %s18
      %p227 = scmp.lt.s32.totalorder %s18, 3
      %p228 = pnand %p226, %p227
      %p229 = pneg %p228
      // Predicated region
      $region29: #{tpu_custom_call.1} parent=5 // pred_check
        _
      $region30: #{tpu_custom_call.1} parent=5 // pred_check_branch
        %231 = sbr.rel (%p228) target = $region32
      $region31: #{tpu_custom_call.1} parent=5 // pred_region
        %s232 = ssub.s32 %s18, 1
        %s233 = sand.u32 %s45, 1
        %s234 = scalar_lea.sflag [#allocation3], %s233
        %s235 = sand.u32 %s45, 1
        %s236 = smul.addr %s235, 2
        %s237 = scalar_lea.vmem [#allocation2], %s236
        // Predicated region
        $region33: #{tpu_custom_call.1} parent=31 // pred_check
          %p238 = pneg %p58
        $region34: #{tpu_custom_call.1} parent=31 // pred_check_branch
          %240 = sbr.rel (%p238) target = $region36
        $region35: #{tpu_custom_call.1} parent=31 // pred_region
          %242 = dma.done %s234, 32
        $region36: #{tpu_custom_call.1} parent=31 // pred_fallthru
          _
        %s243 = sand.u32 %s23, 1
        %s244 = scalar_lea.sflag [#allocation6], %s243
        %s245 = sand.u32 %s73, 1
        %s246 = smul.addr %s245, 8
        %s247 = scalar_lea.vmem [#allocation5], %s246
        // Predicated region
        $region37: #{tpu_custom_call.1} parent=31 // pred_check
          %p248 = pneg %p86
        $region38: #{tpu_custom_call.1} parent=31 // pred_check_branch
          %250 = sbr.rel (%p248) target = $region40
        $region39: #{tpu_custom_call.1} parent=31 // pred_region
          %252 = dma.done %s244, 128
        $region40: #{tpu_custom_call.1} parent=31 // pred_fallthru
          _
        %s253 = sand.u32 %s23, 1
        %s254 = scalar_lea.sflag [#allocation6], %s253
        %s255 = sand.u32 %s101, 1
        %s256 = smul.addr %s255, 8
        %s257 = scalar_lea.vmem [#allocation7], %s256
        // Predicated region
        $region41: #{tpu_custom_call.1} parent=31 // pred_check
          %p258 = pneg %p114
        $region42: #{tpu_custom_call.1} parent=31 // pred_check_branch
          %260 = sbr.rel (%p258) target = $region44
        $region43: #{tpu_custom_call.1} parent=31 // pred_region
          %262 = dma.done %s254, 128
        $region44: #{tpu_custom_call.1} parent=31 // pred_fallthru
          _
        %s263 = sand.u32 %s45, 1
        %s264 = scalar_lea.sflag [#allocation3], %s263
        %s265 = sand.u32 %s45, 1
        %s266 = smul.addr %s265, 2
        %s267 = scalar_lea.vmem [#allocation2], %s266
        %p268 = pneg %p58
        %p269 = pneg %p55
        %s270 = sand.u32 %s23, 1
        %s271 = scalar_lea.sflag [#allocation6], %s270
        %s272 = sand.u32 %s73, 1
        %s273 = smul.addr %s272, 8
        %s274 = scalar_lea.vmem [#allocation5], %s273
        %p275 = pneg %p86
        %p276 = pneg %p83
        %s277 = sand.u32 %s23, 1
        %s278 = scalar_lea.sflag [#allocation6], %s277
        %s279 = sand.u32 %s101, 1
        %s280 = smul.addr %s279, 8
        %s281 = scalar_lea.vmem [#allocation7], %s280
        %p282 = pneg %p114
        %p283 = pneg %p111
        %p284 = pneg %p142
        %p285 = pneg %p139
        %s286 = sand.u32 %s129, 1
        %s287 = scalar_lea.sflag [#allocation4], %s286
        %s288 = sand.u32 %s129, 1
        %s289 = smul.addr %s288, 2
        %s290 = scalar_lea.vmem [#allocation8], %s289
        %s291 = smul.u32 2, %s28
        %s292 = smul.u32 2, %s28
        %s293 = smul.u32 2, %s28
        %v294 = vld [vmem:[%s247] sm:$0xff]
        %v295 = vld [vmem:[%s257] sm:$0xff]
        %v296 = vsub.f32 %v295, %v294
        %v297 = vmul.f32 %v296, %v296
        %299 = vst [vmem:[#allocation1] ss:$2 sm:$0xff] %v297
        %v300 = vld.sshfl [vmem:[#allocation1] sm:$0xff pattern:$0x75316420]
        %v301 = vld.sshfl [vmem:[#allocation1 + $0x8] sm:$0xff pattern:$0x75316420]
        %vm304 = vcmask 1043456
        %v305 = vsel %vm304, %v300, 0.0
        %v306 = vrot.slane %v305, 4
        %v307 = vadd.f32 %v305, %v306
        %v308 = vrot.slane %v307, 2
        %v309 = vadd.f32 %v307, %v308
        %v310 = vrot.slane %v309, 1
        %v311 = vadd.f32 %v309, %v310
        %v312 = vsel %vm304, %v301, 0.0
        %v313 = vrot.slane %v312, 4
        %v314 = vadd.f32 %v312, %v313
        %v315 = vrot.slane %v314, 2
        %v316 = vadd.f32 %v314, %v315
        %v317 = vrot.slane %v316, 1
        %v318 = vadd.f32 %v316, %v317
        %v319 = vld [vmem:[%s237] sm:$0x3]
        %v321 = vperm.slane %v319, 0
        %v322 = vperm.slane %v319, 1
        %v325 = vmul.f32 %v311, %v321
        %v326 = vmul.f32 %v318, %v322
        %vm327 = vcmask 1040384
        %v328 = vsel %vm327, %v325, 0.0
        %v329 = vsel %vm327, %v326, 0.0
        %v330 = vadd.f32 %v328, %v329
        %331 = vadd.xlane.f32.xlu0 %v330
        %v332 = vpop.xlane.xlu0 %331
        %v333 = vrot.slane %v332, 4
        %v334 = vadd.f32 %v332, %v333
        %v335 = vrot.slane %v334, 2
        %v336 = vadd.f32 %v334, %v335
        %v337 = vrot.slane %v336, 1
        %v338 = vadd.f32 %v336, %v337
        %s339 = vtos %v338
        %v340 = vsel %vm327, %v321, 0.0
        %v341 = vsel %vm327, %v322, 0.0
        %v342 = vadd.f32 %v340, %v341
        %343 = vadd.xlane.f32.xlu0 %v342
        %v344 = vpop.xlane.xlu0 %343
        %v345 = vrot.slane %v344, 4
        %v346 = vadd.f32 %v344, %v345
        %v347 = vrot.slane %v346, 2
        %v348 = vadd.f32 %v346, %v347
        %v349 = vrot.slane %v348, 1
        %v350 = vadd.f32 %v348, %v349
        %s351 = vtos %v350
        %v352 = vlaneseq
        %v353 = vshrl.u32 %v352, 7
        %vm354 = vcmp.eq.s32.totalorder %v353, 0
        %v355 = vstv %s339
        %v356 = vstv %s351
        %v357 = vsel %vm354, %v355, %v356
        %358 = vst [vmem:[%s290] sm:$0x3] %v357
        %s359 = sand.u32 %s129, 1
        %s360 = scalar_lea.sflag [#allocation4], %s359
        %s361 = sand.u32 %s129, 1
        %s362 = smul.addr %s361, 2
        %s363 = scalar_lea.vmem [#allocation8], %s362
        // Predicated region
        $region45: #{tpu_custom_call.1} parent=31 // pred_check
          %p364 = pneg %p139
        $region46: #{tpu_custom_call.1} parent=31 // pred_check_branch
          %366 = sbr.rel (%p364) target = $region48
        $region47: #{tpu_custom_call.1} parent=31 // pred_region
          %368 = vsyncadd %s360, 0
          %s369 = sadd.s32 %s28, %s27
          %s370 = smul.addr %s369, 2
          %s371 = scalar_lea.hbm %s3, %s370
          %s373 = sshll.u32 %s363, 4
          %s374 = int_to_ptr.vmem [resolvable:$true] %s373
          %s375 = sshll.u32 %s371, 4
          %s376 = int_to_ptr.hbm [resolvable:$true] %s375
          %378 = dma.vmem_to_hbm [thread:$0]  %s374, 32, %s376, %s360
        $region48: #{tpu_custom_call.1} parent=31 // pred_fallthru
          _
      $region32: #{tpu_custom_call.1} parent=5 // pred_fallthru
        _
      %p379 = scmp.le.s32.totalorder 2, %s18
      // Predicated region
      $region49: #{tpu_custom_call.1} parent=5 // pred_check
        %p380 = pneg %p379
      $region50: #{tpu_custom_call.1} parent=5 // pred_check_branch
        %382 = sbr.rel (%p380) target = $region52
      $region51: #{tpu_custom_call.1} parent=5 // pred_region
        %s383 = ssub.s32 %s18, 2
        // Predicated region
        $region53: #{tpu_custom_call.1} parent=51 // pred_check
          %p384 = pneg %p145
        $region54: #{tpu_custom_call.1} parent=51 // pred_check_branch
          %386 = sbr.rel (%p384) target = $region56
        $region55: #{tpu_custom_call.1} parent=51 // pred_region
          %s387 = sand.u32 %s130, 1
          %s388 = scalar_lea.sflag [#allocation4], %s387
          %s389 = sand.u32 %s130, 1
          %s390 = smul.addr %s389, 2
          %s391 = scalar_lea.vmem [#allocation8], %s390
          %393 = dma.done %s388, 32
        $region56: #{tpu_custom_call.1} parent=51 // pred_fallthru
          _
      $region52: #{tpu_custom_call.1} parent=5 // pred_fallthru
        _
    $region6: #{tpu_custom_call.1} parent=1 // loop_footer
      %s22 = sadd.s32 1, %s18
    $region7: #{tpu_custom_call.1} parent=1 // loop_footer_branch
      %17 = sbr.rel target = $region3
    $region8: #{tpu_custom_call.1} parent=1 // loop_exit
      _
    %394 = vsyncpa [#allocation3], 1
    %s395 = scalar_lea.sflag [#allocation3], 1
    %396 = vsyncpa %s395, 1
    %397 = vsyncpa [#allocation6], 1
    %s398 = scalar_lea.sflag [#allocation6], 1
    %399 = vsyncpa %s398, 1
    %400 = vsyncpa [#allocation4], 1
    %s401 = scalar_lea.sflag [#allocation4], 1
    %402 = vsyncpa %s401, 1

</llo_original>
